<compile_context>
chip_gen: v7x
topology: tpu7x:2x2x1
jax: 0.10.0
libtpu: 0.0.40
codegen_flags: <defaults>
</compile_context>

<pallas_src>
import jax
import jax.numpy as jnp
import numpy as np
from jax.experimental import pallas as pl
from jax.experimental.pallas import tpu as pltpu

# Small, module-consistent problem sizes.
B, C, H, W = 2, 16, 16, 16          # batch, in_channels, spatial
RED = 4                             # reduction_ratio (16 default too big for C=16)
CR = C // RED                       # hidden channels of the squeeze-excite MLP
COUT = 8                            # out_channels of channel_reduction
K = 7                               # spatial-attention kernel size
PAD = K // 2

WC = W * C                          # lane-dense input row width  (256)
KW = K * W                          # pass-1 conv matmul output width (112)
WO = W * COUT                       # lane-dense output row width (128)


def ssam_kernel(x_ref, pool_ref, w1_ref, b1_ref, w2_ref, b2_ref,
                etile_ref, m_ref, b7_ref, wrbig_ref, erep_ref, brrep_ref,
                o_ref):
    """Whole batch in one step.  x_ref: (B, H, W*C) lane-dense f32."""
    f32 = jnp.float32
    x = x_ref[...]                                             # (B, H, W*C)

    # ---- spectral (channel) attention: GAP -> 1x1 -> ReLU -> 1x1 -> sigmoid
    col_sum = jnp.sum(x, axis=1)                               # (B, W*C)  (XLU)
    # pool folds the strided per-channel gather and the 1/(H*W) mean.
    avg = jnp.dot(col_sum, pool_ref[...],
                  preferred_element_type=f32)                  # (B, C)
    h1 = jnp.maximum(jnp.dot(avg, w1_ref[...],
                             preferred_element_type=f32) + b1_ref[...], 0.0)
    sa = jax.nn.sigmoid(jnp.dot(h1, w2_ref[...],
                                preferred_element_type=f32) + b2_ref[...])
    # broadcast sa over W in the lane-dense layout via a 0/1 expansion matmul
    sa_rep = jnp.dot(sa, etile_ref[...],
                     preferred_element_type=f32)               # (B, W*C)
    x1 = x * sa_rep[:, None, :]                                # (B, H, W*C)

    x1_rows = x1.reshape(B * H, WC)                            # free (leading dims)

    # ---- spatial attention: 7x7 conv (C -> 1), padding=3, then sigmoid
    # Pass 1 (x-shifts + channel contraction) as ONE MXU matmul:
    #   v1[(b,y), dy*W + xo] = sum_{dx,c} x1[b,y,xo+dx-3,c] * w7[dy,dx,c]
    v1 = jnp.dot(x1_rows, m_ref[...],
                 preferred_element_type=f32)                   # (B*H, K*W)
    v1 = v1.reshape(B, H, KW)
    zpad = jnp.zeros((B, PAD, KW), f32)
    v1p = jnp.concatenate([zpad, v1, zpad], axis=1)            # (B, H+6, K*W)

    # Pass 2 (y-shifts): 7 small shifted plane adds, boundaries are zero.
    # Balanced-tree sum keeps the VPU dependency chain at log depth.
    terms = [v1p[:, dy:dy + H, dy * W:(dy + 1) * W] for dy in range(K)]
    while len(terms) > 1:
        nxt = [terms[i] + terms[i + 1] for i in range(0, len(terms) - 1, 2)]
        if len(terms) % 2:
            nxt.append(terms[-1])
        terms = nxt
    spa = jax.nn.sigmoid(terms[0] + b7_ref[...])               # (B, H, W)

    # broadcast spa over COUT lanes via a 0/1 expansion matmul
    spa_rows = spa.reshape(B * H, W)
    spa_rep = jnp.dot(spa_rows, erep_ref[...],
                      preferred_element_type=f32)              # (B*H, W*COUT)

    # ---- channel reduction: block-diagonal 1x1 conv straight into the
    # lane-dense output layout; spatial gate applied after (bias unscaled).
    z = jnp.dot(x1_rows, wrbig_ref[...],
                preferred_element_type=f32)                    # (B*H, W*COUT)
    out_rows = z * spa_rep + brrep_ref[...]
    o_ref[...] = out_rows.reshape(B, H, WO)


def _full_spec(shape):
    nd = len(shape)
    return pl.BlockSpec(shape, lambda i, _nd=nd: (0,) * _nd)


def ssam_forward(x_nhwc, params):
    """x_nhwc: (B, H, W, C) f32 -> (B, H, W, COUT) f32."""
    w1, b1, w2, b2, w7_kkc, b7, wr, br = params

    # ---- host-built constant / derived matrices (pure layout plumbing) ----
    # GAP pooling matrix: (W*C, C), includes 1/(H*W).
    pool = jnp.asarray(np.tile(np.eye(C, dtype=np.float32), (W, 1)) / float(H * W))
    # sa expansion: (C, W*C), sa_rep[b, w*C+c] = sa[b, c].
    etile = jnp.asarray(np.tile(np.eye(C, dtype=np.float32), (1, W)))
    # spa expansion: (W, W*COUT), spa_rep[., w*COUT+o] = spa[., w].
    erep = jnp.asarray(np.repeat(np.eye(W, dtype=np.float32), COUT, axis=1))

    # Block-Toeplitz matrix folding the 7x7 conv's x-shifts + channel
    # contraction:  m[x_in*C + c, dy*W + x_out] = w7[dy, x_in-x_out+3, c].
    xi = np.arange(WC) // C
    cc = np.arange(WC) % C
    dy = np.arange(KW) // W
    xo = np.arange(KW) % W
    dxm = xi[:, None] - xo[None, :] + PAD                      # (W*C, K*W)
    valid = (dxm >= 0) & (dxm < K)
    gathered = w7_kkc[dy[None, :], np.clip(dxm, 0, K - 1), cc[:, None]]
    m_toep = jnp.where(jnp.asarray(valid), gathered, 0.0).astype(jnp.float32)

    # Block-diagonal channel-reduction matrix: (W*C, W*COUT).
    wr_big = jnp.kron(jnp.eye(W, dtype=jnp.float32), wr)
    # Lane-dense bias: (1, W*COUT).
    br_rep = jnp.tile(br, (1, W))

    x_lane = x_nhwc.reshape(B, H, WC)                          # lane-dense view

    out_lane = pl.pallas_call(
        ssam_kernel,
        out_shape=jax.ShapeDtypeStruct((B, H, WO), jnp.float32),
        grid_spec=pltpu.PrefetchScalarGridSpec(
            num_scalar_prefetch=0,
            grid=(1,),
            in_specs=[
                _full_spec((B, H, WC)),   # x (lane-dense)
                _full_spec((WC, C)),      # pool
                _full_spec((C, CR)),      # w1 (squeeze)
                _full_spec((1, CR)),      # b1
                _full_spec((CR, C)),      # w2 (excite)
                _full_spec((1, C)),       # b2
                _full_spec((C, WC)),      # etile
                _full_spec((WC, KW)),     # m_toep (7x7 conv pass 1)
                _full_spec((1, 1)),       # b7
                _full_spec((WC, WO)),     # wr_big (channel reduction)
                _full_spec((W, WO)),      # erep
                _full_spec((1, WO)),      # br_rep
            ],
            out_specs=_full_spec((B, H, WO)),
        ),
        compiler_params=pltpu.CompilerParams(
            dimension_semantics=("arbitrary",)),
    )(x_lane, pool, w1, b1, w2, b2, etile, m_toep, b7, wr_big, erep, br_rep)

    return out_lane.reshape(B, H, W, COUT)


def ssam_ref(x_nhwc, w1, b1, w2, b2, w7_kkc, b7, wr, br):
    """Pure-JAX reference (mirrors the PyTorch forward, NHWC)."""
    avg = jnp.mean(x_nhwc, axis=(1, 2), keepdims=True)                 # (B,1,1,C)
    h = jax.nn.relu(jnp.einsum('bijc,cr->bijr', avg, w1) + b1[0])
    sa = jax.nn.sigmoid(jnp.einsum('bijr,rc->bijc', h, w2) + b2[0])    # (B,1,1,C)
    x1 = x_nhwc * sa
    w7_hwio = w7_kkc.reshape(K, K, C, 1)
    spa_lin = jax.lax.conv_general_dilated(
        x1, w7_hwio, (1, 1), 'SAME',
        dimension_numbers=('NHWC', 'HWIO', 'NHWC')) + b7[0, 0]
    spa = jax.nn.sigmoid(spa_lin)                                      # (B,H,W,1)
    x2 = x1 * spa
    return jnp.einsum('bhwc,co->bhwo', x2, wr) + br[0]


if __name__ == "__main__":
    key = jax.random.PRNGKey(0)
    ks = jax.random.split(key, 9)

    # Deterministic synthetic inputs / parameters (PyTorch conv weights as matrices).
    x_nchw = jax.random.normal(ks[0], (B, C, H, W), jnp.float32)       # NCHW like PyTorch
    x_nhwc = jnp.transpose(x_nchw, (0, 2, 3, 1))                       # kernel layout

    w1 = 0.2 * jax.random.normal(ks[1], (C, CR), jnp.float32)          # conv1x1 C->CR
    b1 = 0.1 * jax.random.normal(ks[2], (1, CR), jnp.float32)
    w2 = 0.2 * jax.random.normal(ks[3], (CR, C), jnp.float32)          # conv1x1 CR->C
    b2 = 0.1 * jax.random.normal(ks[4], (1, C), jnp.float32)
    w7_kkc = 0.05 * jax.random.normal(ks[5], (K, K, C), jnp.float32)   # conv7x7 C->1
    b7 = 0.1 * jax.random.normal(ks[6], (1, 1), jnp.float32)
    wr = 0.2 * jax.random.normal(ks[7], (C, COUT), jnp.float32)        # conv1x1 C->COUT
    br = 0.1 * jax.random.normal(ks[8], (1, COUT), jnp.float32)

    params = (w1, b1, w2, b2, w7_kkc, b7, wr, br)

    out = ssam_forward(x_nhwc, params)
    out = jax.block_until_ready(out)

    ref = ssam_ref(x_nhwc, w1, b1, w2, b2, w7_kkc, b7, wr, br)
    assert out.shape == (B, H, W, COUT)
    assert np.allclose(np.asarray(out), np.asarray(ref), atol=1e-3, rtol=1e-3)

    print("KERNEL_OK")
</pallas_src>

<mosaic_0001>
module attributes {stable_mosaic.version = 11 : i64} {
  func.func @ssam_kernel(%arg0: i32, %arg1: memref<2x16x256xf32, #tpu.memory_space<vmem>>, %arg2: memref<256x16xf32, #tpu.memory_space<vmem>>, %arg3: memref<16x4xf32, #tpu.memory_space<vmem>>, %arg4: memref<1x4xf32, #tpu.memory_space<vmem>>, %arg5: memref<4x16xf32, #tpu.memory_space<vmem>>, %arg6: memref<1x16xf32, #tpu.memory_space<vmem>>, %arg7: memref<16x256xf32, #tpu.memory_space<vmem>>, %arg8: memref<256x112xf32, #tpu.memory_space<vmem>>, %arg9: memref<1x1xf32, #tpu.memory_space<vmem>>, %arg10: memref<256x128xf32, #tpu.memory_space<vmem>>, %arg11: memref<16x128xf32, #tpu.memory_space<vmem>>, %arg12: memref<1x128xf32, #tpu.memory_space<vmem>>, %arg13: memref<2x16x128xf32, #tpu.memory_space<vmem>>) attributes {dimension_semantics = [#tpu.dimension_semantics<arbitrary>], iteration_bounds = array<i64: 1>, scalar_prefetch = 0 : i64, scratch_operands = 0 : i64, tpu.core_type = #tpu.core_type<tc>, window_params = [{pipeline_mode = #tpu.pipeline_mode<synchronous>, transform_indices = @transform_0, window_bounds = array<i64: 2, 16, 256>}, {pipeline_mode = #tpu.pipeline_mode<synchronous>, transform_indices = @transform_1, window_bounds = array<i64: 256, 16>}, {pipeline_mode = #tpu.pipeline_mode<synchronous>, transform_indices = @transform_2, window_bounds = array<i64: 16, 4>}, {pipeline_mode = #tpu.pipeline_mode<synchronous>, transform_indices = @transform_3, window_bounds = array<i64: 1, 4>}, {pipeline_mode = #tpu.pipeline_mode<synchronous>, transform_indices = @transform_4, window_bounds = array<i64: 4, 16>}, {pipeline_mode = #tpu.pipeline_mode<synchronous>, transform_indices = @transform_5, window_bounds = array<i64: 1, 16>}, {pipeline_mode = #tpu.pipeline_mode<synchronous>, transform_indices = @transform_6, window_bounds = array<i64: 16, 256>}, {pipeline_mode = #tpu.pipeline_mode<synchronous>, transform_indices = @transform_7, window_bounds = array<i64: 256, 112>}, {pipeline_mode = #tpu.pipeline_mode<synchronous>, transform_indices = @transform_8, window_bounds = array<i64: 1, 1>}, {pipeline_mode = #tpu.pipeline_mode<synchronous>, transform_indices = @transform_9, window_bounds = array<i64: 256, 128>}, {pipeline_mode = #tpu.pipeline_mode<synchronous>, transform_indices = @transform_10, window_bounds = array<i64: 16, 128>}, {pipeline_mode = #tpu.pipeline_mode<synchronous>, transform_indices = @transform_11, window_bounds = array<i64: 1, 128>}, {pipeline_mode = #tpu.pipeline_mode<synchronous>, transform_indices = @transform_12, window_bounds = array<i64: 2, 16, 128>}]} {
    %c0 = arith.constant 0 : index
    %c0_0 = arith.constant 0 : index
    %c0_1 = arith.constant 0 : index
    %0 = vector.load %arg1[%c0, %c0_0, %c0_1] : memref<2x16x256xf32, #tpu.memory_space<vmem>>, vector<2x16x256xf32>
    %cst = arith.constant dense<0.000000e+00> : vector<2x256xf32>
    %1 = vector.multi_reduction <add>, %0, %cst [1] : vector<2x16x256xf32> to vector<2x256xf32>
    %c0_2 = arith.constant 0 : index
    %c0_3 = arith.constant 0 : index
    %2 = vector.load %arg2[%c0_2, %c0_3] : memref<256x16xf32, #tpu.memory_space<vmem>>, vector<256x16xf32>
    %cst_4 = arith.constant dense<0.000000e+00> : vector<2x16xf32>
    %3 = tpu.matmul %1, %2, %cst_4 {dimension_numbers = #tpu.dot_dimension_numbers<[1], [0], [0], [1], [0, 0, 1, 1], [], []>} : vector<2x256xf32>, vector<256x16xf32>, vector<2x16xf32> -> vector<2x16xf32>
    %c0_5 = arith.constant 0 : index
    %c0_6 = arith.constant 0 : index
    %4 = vector.load %arg3[%c0_5, %c0_6] : memref<16x4xf32, #tpu.memory_space<vmem>>, vector<16x4xf32>
    %cst_7 = arith.constant dense<0.000000e+00> : vector<2x4xf32>
    %5 = tpu.matmul %3, %4, %cst_7 {dimension_numbers = #tpu.dot_dimension_numbers<[1], [0], [0], [1], [0, 0, 1, 1], [], []>} : vector<2x16xf32>, vector<16x4xf32>, vector<2x4xf32> -> vector<2x4xf32>
    %c0_8 = arith.constant 0 : index
    %c0_9 = arith.constant 0 : index
    %6 = vector.load %arg4[%c0_8, %c0_9] : memref<1x4xf32, #tpu.memory_space<vmem>>, vector<1x4xf32>
    %7 = vector.broadcast %6 : vector<1x4xf32> to vector<2x4xf32>
    %8 = arith.addf %5, %7 : vector<2x4xf32>
    %cst_10 = arith.constant 0.000000e+00 : f32
    %9 = vector.broadcast %cst_10 : f32 to vector<2x4xf32>
    %10 = arith.maximumf %8, %9 : vector<2x4xf32>
    %c0_11 = arith.constant 0 : index
    %c0_12 = arith.constant 0 : index
    %11 = vector.load %arg5[%c0_11, %c0_12] : memref<4x16xf32, #tpu.memory_space<vmem>>, vector<4x16xf32>
    %cst_13 = arith.constant dense<0.000000e+00> : vector<2x16xf32>
    %12 = tpu.matmul %10, %11, %cst_13 {dimension_numbers = #tpu.dot_dimension_numbers<[1], [0], [0], [1], [0, 0, 1, 1], [], []>} : vector<2x4xf32>, vector<4x16xf32>, vector<2x16xf32> -> vector<2x16xf32>
    %c0_14 = arith.constant 0 : index
    %c0_15 = arith.constant 0 : index
    %13 = vector.load %arg6[%c0_14, %c0_15] : memref<1x16xf32, #tpu.memory_space<vmem>>, vector<1x16xf32>
    %14 = vector.broadcast %13 : vector<1x16xf32> to vector<2x16xf32>
    %15 = arith.addf %12, %14 : vector<2x16xf32>
    %16 = arith.negf %15 : vector<2x16xf32>
    %17 = math.exp %16 : vector<2x16xf32>
    %cst_16 = arith.constant 1.000000e+00 : f32
    %18 = vector.broadcast %cst_16 : f32 to vector<2x16xf32>
    %19 = arith.addf %18, %17 : vector<2x16xf32>
    %20 = arith.divf %18, %19 : vector<2x16xf32>
    %c0_17 = arith.constant 0 : index
    %c0_18 = arith.constant 0 : index
    %21 = vector.load %arg7[%c0_17, %c0_18] : memref<16x256xf32, #tpu.memory_space<vmem>>, vector<16x256xf32>
    %cst_19 = arith.constant dense<0.000000e+00> : vector<2x256xf32>
    %22 = tpu.matmul %20, %21, %cst_19 {dimension_numbers = #tpu.dot_dimension_numbers<[1], [0], [0], [1], [0, 0, 1, 1], [], []>} : vector<2x16xf32>, vector<16x256xf32>, vector<2x256xf32> -> vector<2x256xf32>
    %23 = vector.shape_cast %22 : vector<2x256xf32> to vector<2x1x256xf32>
    %24 = vector.broadcast %23 : vector<2x1x256xf32> to vector<2x16x256xf32>
    %25 = arith.mulf %0, %24 : vector<2x16x256xf32>
    %26 = vector.shape_cast %25 : vector<2x16x256xf32> to vector<32x256xf32>
    %c0_20 = arith.constant 0 : index
    %c0_21 = arith.constant 0 : index
    %27 = vector.load %arg8[%c0_20, %c0_21] : memref<256x112xf32, #tpu.memory_space<vmem>>, vector<256x112xf32>
    %cst_22 = arith.constant dense<0.000000e+00> : vector<32x112xf32>
    %28 = tpu.matmul %26, %27, %cst_22 {dimension_numbers = #tpu.dot_dimension_numbers<[1], [0], [0], [1], [0, 0, 1, 1], [], []>} : vector<32x256xf32>, vector<256x112xf32>, vector<32x112xf32> -> vector<32x112xf32>
    %29 = vector.shape_cast %28 : vector<32x112xf32> to vector<2x16x112xf32>
    %cst_23 = arith.constant 0.000000e+00 : f32
    %30 = vector.broadcast %cst_23 : f32 to vector<2x3x112xf32>
    %31 = tpu.concatenate %30, %29, %30 in 1 : vector<2x3x112xf32>, vector<2x16x112xf32>, vector<2x3x112xf32> -> vector<2x22x112xf32>
    %32 = vector.extract_strided_slice %31 {offsets = [0, 0, 0], sizes = [2, 16, 16], strides = [1, 1, 1]} : vector<2x22x112xf32> to vector<2x16x16xf32>
    %33 = vector.extract_strided_slice %31 {offsets = [0, 1, 16], sizes = [2, 16, 16], strides = [1, 1, 1]} : vector<2x22x112xf32> to vector<2x16x16xf32>
    %34 = vector.extract_strided_slice %31 {offsets = [0, 2, 32], sizes = [2, 16, 16], strides = [1, 1, 1]} : vector<2x22x112xf32> to vector<2x16x16xf32>
    %35 = vector.extract_strided_slice %31 {offsets = [0, 3, 48], sizes = [2, 16, 16], strides = [1, 1, 1]} : vector<2x22x112xf32> to vector<2x16x16xf32>
    %36 = vector.extract_strided_slice %31 {offsets = [0, 4, 64], sizes = [2, 16, 16], strides = [1, 1, 1]} : vector<2x22x112xf32> to vector<2x16x16xf32>
    %37 = vector.extract_strided_slice %31 {offsets = [0, 5, 80], sizes = [2, 16, 16], strides = [1, 1, 1]} : vector<2x22x112xf32> to vector<2x16x16xf32>
    %38 = vector.extract_strided_slice %31 {offsets = [0, 6, 96], sizes = [2, 16, 16], strides = [1, 1, 1]} : vector<2x22x112xf32> to vector<2x16x16xf32>
    %39 = arith.addf %32, %33 : vector<2x16x16xf32>
    %40 = arith.addf %34, %35 : vector<2x16x16xf32>
    %41 = arith.addf %36, %37 : vector<2x16x16xf32>
    %42 = arith.addf %39, %40 : vector<2x16x16xf32>
    %43 = arith.addf %41, %38 : vector<2x16x16xf32>
    %44 = arith.addf %42, %43 : vector<2x16x16xf32>
    %c0_24 = arith.constant 0 : index
    %c0_25 = arith.constant 0 : index
    %45 = vector.load %arg9[%c0_24, %c0_25] : memref<1x1xf32, #tpu.memory_space<vmem>>, vector<1x1xf32>
    %46 = vector.shape_cast %45 : vector<1x1xf32> to vector<1x1x1xf32>
    %47 = vector.broadcast %46 : vector<1x1x1xf32> to vector<2x16x16xf32>
    %48 = arith.addf %44, %47 : vector<2x16x16xf32>
    %49 = arith.negf %48 : vector<2x16x16xf32>
    %50 = math.exp %49 : vector<2x16x16xf32>
    %cst_26 = arith.constant 1.000000e+00 : f32
    %51 = vector.broadcast %cst_26 : f32 to vector<2x16x16xf32>
    %52 = arith.addf %51, %50 : vector<2x16x16xf32>
    %53 = arith.divf %51, %52 : vector<2x16x16xf32>
    %54 = vector.shape_cast %53 : vector<2x16x16xf32> to vector<32x16xf32>
    %c0_27 = arith.constant 0 : index
    %c0_28 = arith.constant 0 : index
    %55 = vector.load %arg11[%c0_27, %c0_28] : memref<16x128xf32, #tpu.memory_space<vmem>>, vector<16x128xf32>
    %cst_29 = arith.constant dense<0.000000e+00> : vector<32x128xf32>
    %56 = tpu.matmul %54, %55, %cst_29 {dimension_numbers = #tpu.dot_dimension_numbers<[1], [0], [0], [1], [0, 0, 1, 1], [], []>} : vector<32x16xf32>, vector<16x128xf32>, vector<32x128xf32> -> vector<32x128xf32>
    %c0_30 = arith.constant 0 : index
    %c0_31 = arith.constant 0 : index
    %57 = vector.load %arg10[%c0_30, %c0_31] : memref<256x128xf32, #tpu.memory_space<vmem>>, vector<256x128xf32>
    %cst_32 = arith.constant dense<0.000000e+00> : vector<32x128xf32>
    %58 = tpu.matmul %26, %57, %cst_32 {dimension_numbers = #tpu.dot_dimension_numbers<[1], [0], [0], [1], [0, 0, 1, 1], [], []>} : vector<32x256xf32>, vector<256x128xf32>, vector<32x128xf32> -> vector<32x128xf32>
    %59 = arith.mulf %58, %56 : vector<32x128xf32>
    %c0_33 = arith.constant 0 : index
    %c0_34 = arith.constant 0 : index
    %60 = vector.load %arg12[%c0_33, %c0_34] : memref<1x128xf32, #tpu.memory_space<vmem>>, vector<1x128xf32>
    %61 = vector.broadcast %60 : vector<1x128xf32> to vector<32x128xf32>
    %62 = arith.addf %59, %61 : vector<32x128xf32>
    %63 = vector.shape_cast %62 : vector<32x128xf32> to vector<2x16x128xf32>
    %c0_35 = arith.constant 0 : index
    %c0_36 = arith.constant 0 : index
    %c0_37 = arith.constant 0 : index
    %64 = vector.load %arg13[%c0_35, %c0_36, %c0_37] : memref<2x16x128xf32, #tpu.memory_space<vmem>>, vector<2x16x128xf32>
    tpu.vector_store %arg13[%c0_35, %c0_36, %c0_37], %63 {strides = array<i32>} : memref<2x16x128xf32, #tpu.memory_space<vmem>>, vector<2x16x128xf32>,
    return
  }
  func.func @transform_0(%arg0: i32) -> (i32, i32, i32) {
    %c0_i32 = arith.constant 0 : i32
    %c0_i32_0 = arith.constant 0 : i32
    %c0_i32_1 = arith.constant 0 : i32
    %c0_i32_2 = arith.constant 0 : i32
    return %c0_i32, %c0_i32_0, %c0_i32_1 : i32, i32, i32
  }
  func.func @transform_1(%arg0: i32) -> (i32, i32) {
    %c0_i32 = arith.constant 0 : i32
    %c0_i32_0 = arith.constant 0 : i32
    %c0_i32_1 = arith.constant 0 : i32
    return %c0_i32, %c0_i32_0 : i32, i32
  }
  func.func @transform_2(%arg0: i32) -> (i32, i32) {
    %c0_i32 = arith.constant 0 : i32
    %c0_i32_0 = arith.constant 0 : i32
    %c0_i32_1 = arith.constant 0 : i32
    return %c0_i32, %c0_i32_0 : i32, i32
  }
  func.func @transform_3(%arg0: i32) -> (i32, i32) {
    %c0_i32 = arith.constant 0 : i32
    %c0_i32_0 = arith.constant 0 : i32
    %c0_i32_1 = arith.constant 0 : i32
    return %c0_i32, %c0_i32_0 : i32, i32
  }
  func.func @transform_4(%arg0: i32) -> (i32, i32) {
    %c0_i32 = arith.constant 0 : i32
    %c0_i32_0 = arith.constant 0 : i32
    %c0_i32_1 = arith.constant 0 : i32
    return %c0_i32, %c0_i32_0 : i32, i32
  }
  func.func @transform_5(%arg0: i32) -> (i32, i32) {
    %c0_i32 = arith.constant 0 : i32
    %c0_i32_0 = arith.constant 0 : i32
    %c0_i32_1 = arith.constant 0 : i32
    return %c0_i32, %c0_i32_0 : i32, i32
  }
  func.func @transform_6(%arg0: i32) -> (i32, i32) {
    %c0_i32 = arith.constant 0 : i32
    %c0_i32_0 = arith.constant 0 : i32
    %c0_i32_1 = arith.constant 0 : i32
    return %c0_i32, %c0_i32_0 : i32, i32
  }
  func.func @transform_7(%arg0: i32) -> (i32, i32) {
    %c0_i32 = arith.constant 0 : i32
    %c0_i32_0 = arith.constant 0 : i32
    %c0_i32_1 = arith.constant 0 : i32
    return %c0_i32, %c0_i32_0 : i32, i32
  }
  func.func @transform_8(%arg0: i32) -> (i32, i32) {
    %c0_i32 = arith.constant 0 : i32
    %c0_i32_0 = arith.constant 0 : i32
    %c0_i32_1 = arith.constant 0 : i32
    return %c0_i32, %c0_i32_0 : i32, i32
  }
  func.func @transform_9(%arg0: i32) -> (i32, i32) {
    %c0_i32 = arith.constant 0 : i32
    %c0_i32_0 = arith.constant 0 : i32
    %c0_i32_1 = arith.constant 0 : i32
    return %c0_i32, %c0_i32_0 : i32, i32
  }
  func.func @transform_10(%arg0: i32) -> (i32, i32) {
    %c0_i32 = arith.constant 0 : i32
    %c0_i32_0 = arith.constant 0 : i32
    %c0_i32_1 = arith.constant 0 : i32
    return %c0_i32, %c0_i32_0 : i32, i32
  }
  func.func @transform_11(%arg0: i32) -> (i32, i32) {
    %c0_i32 = arith.constant 0 : i32
    %c0_i32_0 = arith.constant 0 : i32
    %c0_i32_1 = arith.constant 0 : i32
    return %c0_i32, %c0_i32_0 : i32, i32
  }
  func.func @transform_12(%arg0: i32) -> (i32, i32, i32) {
    %c0_i32 = arith.constant 0 : i32
    %c0_i32_0 = arith.constant 0 : i32
    %c0_i32_1 = arith.constant 0 : i32
    %c0_i32_2 = arith.constant 0 : i32
    return %c0_i32, %c0_i32_0, %c0_i32_1 : i32, i32, i32
  }
}

</mosaic_0001>

<llo_original>
// kernel: tpu_custom_call.1
$region0: #{tpu_custom_call.1}
  #allocation0 [shape = 'u32[]', space=smem, size = 0x4, offset = 0x4, fixed_abs, tag = 'smem constant byte address 0x4 - core index']
  #allocation1 [shape = 'u32[144,128]{1,0:T(1,128)}', space=vmem, size = 0x12000, scoped, tag = 'internal scratch']
  #allocation2 [shape = 'f32[1,1]{1,0:T(1,128)S(1)}', space=vmem, size = 0x200, scoped, tag = 'scoped memory for tpu_custom_call.1']
  %s0 = inlined_call_operand.vmem [shape: f32[2,16,256], index: 0, kind: input, shape index: {}]
  %s1 = inlined_call_operand.vmem [shape: f32[256,16], index: 1, kind: input, shape index: {}]
  %s2 = inlined_call_operand.vmem [shape: f32[16,4], index: 2, kind: input, shape index: {}]
  %s3 = inlined_call_operand.vmem [shape: f32[1,4], index: 3, kind: input, shape index: {}]
  %s4 = inlined_call_operand.vmem [shape: f32[4,16], index: 4, kind: input, shape index: {}]
  %s5 = inlined_call_operand.vmem [shape: f32[1,16], index: 5, kind: input, shape index: {}]
  %s6 = inlined_call_operand.vmem [shape: f32[16,256], index: 6, kind: input, shape index: {}]
  %s7 = inlined_call_operand.vmem [shape: f32[256,112], index: 7, kind: input, shape index: {}]
  %s8 = inlined_call_operand.<no memory space> [shape: f32[1,1], index: 8, kind: input, shape index: {}]
  %s9 = inlined_call_operand.vmem [shape: f32[256,128], index: 9, kind: input, shape index: {}]
  %s10 = inlined_call_operand.vmem [shape: f32[16,128], index: 10, kind: input, shape index: {}]
  %s11 = inlined_call_operand.vmem [shape: f32[1,128], index: 11, kind: input, shape index: {}]
  %s12 = inlined_call_operand.hbm [shape: f32[2,16,128], index: 12, kind: output, shape index: {}]
  %s13 = sld [smem:[#allocation0]]
  $region58: #{tpu_custom_call.1} parent=0
    _
  %s15 = ssub.s32 1, %s13
  %s16 = scalar_select 0, %s15, %s13
  %v17 = vstv %s8
  %18 = vst [vmem:[#allocation2] sm:$0x1] %v17
  $region1: #{tpu_custom_call.1} parent=0
    #allocation3 [shape = 'u8[16384]{0}', space=vmem, size = 0x4000, scoped, tag = 'output window, operand 0, single buffered']
    #allocation4 [shape = 's32[1]{0}', space=sflag, size = 0x4, scoped, tag = 'scoped memory for tpu_custom_call.1']
    %19 = vsyncpa [#allocation4], 0
    // Predicated region
    $region2: #{tpu_custom_call.1} parent=1 // pred_check
      _
    $region3: #{tpu_custom_call.1} parent=1 // pred_check_branch
      %21 = sbr.rel (0) target = $region5
    $region4: #{tpu_custom_call.1} parent=1 // pred_region
      _
    $region5: #{tpu_custom_call.1} parent=1 // pred_fallthru
      _
    // Predicated region
    $region6: #{tpu_custom_call.1} parent=1 // pred_check
      _
    $region7: #{tpu_custom_call.1} parent=1 // pred_check_branch
      %23 = sbr.rel (0) target = $region9
    $region8: #{tpu_custom_call.1} parent=1 // pred_region
      _
    $region9: #{tpu_custom_call.1} parent=1 // pred_fallthru
      _
    // Predicated region
    $region10: #{tpu_custom_call.1} parent=1 // pred_check
      _
    $region11: #{tpu_custom_call.1} parent=1 // pred_check_branch
      %25 = sbr.rel (0) target = $region13
    $region12: #{tpu_custom_call.1} parent=1 // pred_region
      _
    $region13: #{tpu_custom_call.1} parent=1 // pred_fallthru
      _
    // Predicated region
    $region14: #{tpu_custom_call.1} parent=1 // pred_check
      _
    $region15: #{tpu_custom_call.1} parent=1 // pred_check_branch
      %27 = sbr.rel (0) target = $region17
    $region16: #{tpu_custom_call.1} parent=1 // pred_region
      _
    $region17: #{tpu_custom_call.1} parent=1 // pred_fallthru
      _
    // Predicated region
    $region18: #{tpu_custom_call.1} parent=1 // pred_check
      _
    $region19: #{tpu_custom_call.1} parent=1 // pred_check_branch
      %29 = sbr.rel (0) target = $region21
    $region20: #{tpu_custom_call.1} parent=1 // pred_region
      _
    $region21: #{tpu_custom_call.1} parent=1 // pred_fallthru
      _
    // Predicated region
    $region22: #{tpu_custom_call.1} parent=1 // pred_check
      _
    $region23: #{tpu_custom_call.1} parent=1 // pred_check_branch
      %31 = sbr.rel (0) target = $region25
    $region24: #{tpu_custom_call.1} parent=1 // pred_region
      _
    $region25: #{tpu_custom_call.1} parent=1 // pred_fallthru
      _
    // Predicated region
    $region26: #{tpu_custom_call.1} parent=1 // pred_check
      _
    $region27: #{tpu_custom_call.1} parent=1 // pred_check_branch
      %33 = sbr.rel (0) target = $region29
    $region28: #{tpu_custom_call.1} parent=1 // pred_region
      _
    $region29: #{tpu_custom_call.1} parent=1 // pred_fallthru
      _
    // Predicated region
    $region30: #{tpu_custom_call.1} parent=1 // pred_check
      _
    $region31: #{tpu_custom_call.1} parent=1 // pred_check_branch
      %35 = sbr.rel (0) target = $region33
    $region32: #{tpu_custom_call.1} parent=1 // pred_region
      _
    $region33: #{tpu_custom_call.1} parent=1 // pred_fallthru
      _
    // Predicated region
    $region34: #{tpu_custom_call.1} parent=1 // pred_check
      _
    $region35: #{tpu_custom_call.1} parent=1 // pred_check_branch
      %37 = sbr.rel (0) target = $region37
    $region36: #{tpu_custom_call.1} parent=1 // pred_region
      _
    $region37: #{tpu_custom_call.1} parent=1 // pred_fallthru
      _
    // Predicated region
    $region38: #{tpu_custom_call.1} parent=1 // pred_check
      _
    $region39: #{tpu_custom_call.1} parent=1 // pred_check_branch
      %39 = sbr.rel (0) target = $region41
    $region40: #{tpu_custom_call.1} parent=1 // pred_region
      _
    $region41: #{tpu_custom_call.1} parent=1 // pred_fallthru
      _
    // Predicated region
    $region42: #{tpu_custom_call.1} parent=1 // pred_check
      _
    $region43: #{tpu_custom_call.1} parent=1 // pred_check_branch
      %41 = sbr.rel (0) target = $region45
    $region44: #{tpu_custom_call.1} parent=1 // pred_region
      _
    $region45: #{tpu_custom_call.1} parent=1 // pred_fallthru
      _
    // Predicated region
    $region46: #{tpu_custom_call.1} parent=1 // pred_check
      _
    $region47: #{tpu_custom_call.1} parent=1 // pred_check_branch
      %43 = sbr.rel (0) target = $region49
    $region48: #{tpu_custom_call.1} parent=1 // pred_region
      _
    $region49: #{tpu_custom_call.1} parent=1 // pred_fallthru
      _
    %v44 = vld [vmem:[%s0] sm:$0xff]
    %v45 = vld [vmem:[%s0 + $0x8] sm:$0xff]
    %v46 = vld [vmem:[%s0 + $0x10] sm:$0xff]
    %v47 = vld [vmem:[%s0 + $0x18] sm:$0xff]
    %v48 = vld [vmem:[%s0 + $0x20] sm:$0xff]
    %v49 = vld [vmem:[%s0 + $0x28] sm:$0xff]
    %v50 = vld [vmem:[%s0 + $0x30] sm:$0xff]
    %v51 = vld [vmem:[%s0 + $0x38] sm:$0xff]
    %v52 = vadd.f32 %v44, %v46
    %v53 = vrot.slane %v52, 4
    %v54 = vadd.f32 %v52, %v53
    %v55 = vrot.slane %v54, 2
    %v56 = vadd.f32 %v54, %v55
    %v57 = vrot.slane %v56, 1
    %v58 = vadd.f32 %v56, %v57
    %v59 = vadd.f32 %v45, %v47
    %v60 = vrot.slane %v59, 4
    %v61 = vadd.f32 %v59, %v60
    %v62 = vrot.slane %v61, 2
    %v63 = vadd.f32 %v61, %v62
    %v64 = vrot.slane %v63, 1
    %v65 = vadd.f32 %v63, %v64
    %v66 = vadd.f32 %v48, %v50
    %v67 = vrot.slane %v66, 4
    %v68 = vadd.f32 %v66, %v67
    %v69 = vrot.slane %v68, 2
    %v70 = vadd.f32 %v68, %v69
    %v71 = vrot.slane %v70, 1
    %v72 = vadd.f32 %v70, %v71
    %v73 = vadd.f32 %v49, %v51
    %v74 = vrot.slane %v73, 4
    %v75 = vadd.f32 %v73, %v74
    %v76 = vrot.slane %v75, 2
    %v77 = vadd.f32 %v75, %v76
    %v78 = vrot.slane %v77, 1
    %v79 = vadd.f32 %v77, %v78
    %v80 = vld [vmem:[%s1] sm:$0xff]
    %v81 = vld [vmem:[%s1 + $0x8] sm:$0xff]
    %v82 = vld [vmem:[%s1 + $0x10] sm:$0xff]
    %v83 = vld [vmem:[%s1 + $0x18] sm:$0xff]
    %v84 = vld [vmem:[%s1 + $0x20] sm:$0xff]
    %v85 = vld [vmem:[%s1 + $0x28] sm:$0xff]
    %v86 = vld [vmem:[%s1 + $0x30] sm:$0xff]
    %v87 = vld [vmem:[%s1 + $0x38] sm:$0xff]
    %v88 = vld [vmem:[%s1 + $0x40] sm:$0xff]
    %v89 = vld [vmem:[%s1 + $0x48] sm:$0xff]
    %v90 = vld [vmem:[%s1 + $0x50] sm:$0xff]
    %v91 = vld [vmem:[%s1 + $0x58] sm:$0xff]
    %v92 = vld [vmem:[%s1 + $0x60] sm:$0xff]
    %v93 = vld [vmem:[%s1 + $0x68] sm:$0xff]
    %v94 = vld [vmem:[%s1 + $0x70] sm:$0xff]
    %v95 = vld [vmem:[%s1 + $0x78] sm:$0xff]
    %v96 = vld [vmem:[%s1 + $0x80] sm:$0xff]
    %v97 = vld [vmem:[%s1 + $0x88] sm:$0xff]
    %v98 = vld [vmem:[%s1 + $0x90] sm:$0xff]
    %v99 = vld [vmem:[%s1 + $0x98] sm:$0xff]
    %v100 = vld [vmem:[%s1 + $0xa0] sm:$0xff]
    %v101 = vld [vmem:[%s1 + $0xa8] sm:$0xff]
    %v102 = vld [vmem:[%s1 + $0xb0] sm:$0xff]
    %v103 = vld [vmem:[%s1 + $0xb8] sm:$0xff]
    %v104 = vld [vmem:[%s1 + $0xc0] sm:$0xff]
    %v105 = vld [vmem:[%s1 + $0xc8] sm:$0xff]
    %v106 = vld [vmem:[%s1 + $0xd0] sm:$0xff]
    %v107 = vld [vmem:[%s1 + $0xd8] sm:$0xff]
    %v108 = vld [vmem:[%s1 + $0xe0] sm:$0xff]
    %v109 = vld [vmem:[%s1 + $0xe8] sm:$0xff]
    %v110 = vld [vmem:[%s1 + $0xf0] sm:$0xff]
    %v111 = vld [vmem:[%s1 + $0xf8] sm:$0xff]
    %vm116 = vcmask 1041409
    %v117 = vsel %vm116, %v72, %v58
    %v118 = vsel %vm116, %v79, %v65
    %121 = vmatprep.subr.mxu0 0.0
    %122 = vmatpush1.msra.mxu0 %v80
    %123 = vmatprep.subr.mxu0 0.0
    %124 = vmatpush1.msra.mxu0 %v81
    %125 = vmatprep.subr.mxu0 0.0
    %126 = vmatpush1.msra.mxu0 %v82
    %127 = vmatprep.subr.mxu0 0.0
    %128 = vmatpush1.msra.mxu0 %v83
    %129 = vmatprep.subr.mxu0 0.0
    %130 = vmatpush1.msra.mxu0 %v84
    %131 = vmatprep.subr.mxu0 0.0
    %132 = vmatpush1.msra.mxu0 %v85
    %133 = vmatprep.subr.mxu0 0.0
    %134 = vmatpush1.msra.mxu0 %v86
    %135 = vmatprep.subr.mxu0 0.0
    %136 = vmatpush1.msra.mxu0 %v87
    %137 = vmatprep.subr.mxu0 0.0
    %138 = vmatpush1.msra.mxu0 %v88
    %139 = vmatprep.subr.mxu0 0.0
    %140 = vmatpush1.msra.mxu0 %v89
    %141 = vmatprep.subr.mxu0 0.0
    %142 = vmatpush1.msra.mxu0 %v90
    %143 = vmatprep.subr.mxu0 0.0
    %144 = vmatpush1.msra.mxu0 %v91
    %145 = vmatprep.subr.mxu0 0.0
    %146 = vmatpush1.msra.mxu0 %v92
    %147 = vmatprep.subr.mxu0 0.0
    %148 = vmatpush1.msra.mxu0 %v93
    %149 = vmatprep.subr.mxu0 0.0
    %150 = vmatpush1.msra.mxu0 %v94
    %151 = vmatprep.subr.mxu0 0.0
    %152 = vmatpush1.msra.mxu0 %v95
    %153 = vmatprep.subr.mxu0 0.0
    %154 = vmatpush1.msra.mxu0 %v96
    %155 = vmatprep.subr.mxu0 0.0
    %156 = vmatpush1.msra.mxu0 %v97
    %157 = vmatprep.subr.mxu0 0.0
    %158 = vmatpush1.msra.mxu0 %v98
    %159 = vmatprep.subr.mxu0 0.0
    %160 = vmatpush1.msra.mxu0 %v99
    %161 = vmatprep.subr.mxu0 0.0
    %162 = vmatpush1.msra.mxu0 %v100
    %163 = vmatprep.subr.mxu0 0.0
    %164 = vmatpush1.msra.mxu0 %v101
    %165 = vmatprep.subr.mxu0 0.0
    %166 = vmatpush1.msra.mxu0 %v102
    %167 = vmatprep.subr.mxu0 0.0
    %168 = vmatpush1.msra.mxu0 %v103
    %169 = vmatprep.subr.mxu0 0.0
    %170 = vmatpush1.msra.mxu0 %v104
    %171 = vmatprep.subr.mxu0 0.0
    %172 = vmatpush1.msra.mxu0 %v105
    %173 = vmatprep.subr.mxu0 0.0
    %174 = vmatpush1.msra.mxu0 %v106
    %175 = vmatprep.subr.mxu0 0.0
    %176 = vmatpush1.msra.mxu0 %v107
    %177 = vmatprep.subr.mxu0 0.0
    %178 = vmatpush1.msra.mxu0 %v108
    %179 = vmatprep.subr.mxu0 0.0
    %180 = vmatpush1.msra.mxu0 %v109
    %181 = vmatprep.subr.mxu0 0.0
    %182 = vmatpush1.msra.mxu0 %v110
    %183 = vmatprep.subr.mxu0 0.0
    %184 = vmatpush1.msra.mxu0 %v111
    %185 = vmatprep.mubr.f32.mxu0 %v118
    %186 = vmatmul.mubr.f32.gmra.mrb[0].mxu0 %v117
    %v187 = vpop.f32.mrb[0].mxu0
    %v188 = vadd.f32 0.0, %v187
    %v189 = vpop.f32.mrb[0].mxu0
    %190 = vdwg.mxu0
    %v191 = vld [vmem:[%s2] sm:$0xff]
    %v192 = vld [vmem:[%s2 + $0x8] sm:$0xff]
    %v193 = vld [vmem:[%s3] sm:$0x1]
    %v195 = vlaneseq
    %v196 = vshrl.u32 %v195, 7
    %v197 = vsub.s32 0, %v196
    %v198 = vrot.slane %v193, %v197
    %vm200 = vcmask 130048
    %v202 = vsel %vm200, %v188, 0
    %204 = vmatprep.subr.mxu0 0.0
    %205 = vmatpush1.msra.mxu0 %v191
    %206 = vmatprep.subr.mxu0 0.0
    %207 = vmatpush1.msra.mxu0 %v192
    %208 = vmatprep.subr.mxu0 0.0
    %209 = vmatpush1.msra.mxu0 0.0
    %210 = vmatprep.subr.mxu0 0.0
    %211 = vmatpush1.msra.mxu0 0.0
    %212 = vmatprep.subr.mxu0 0.0
    %213 = vmatpush1.msra.mxu0 0.0
    %214 = vmatprep.subr.mxu0 0.0
    %215 = vmatpush1.msra.mxu0 0.0
    %216 = vmatprep.subr.mxu0 0.0
    %217 = vmatpush1.msra.mxu0 0.0
    %218 = vmatprep.subr.mxu0 0.0
    %219 = vmatpush1.msra.mxu0 0.0
    %220 = vmatprep.subr.mxu0 0.0
    %221 = vmatpush1.msra.mxu0 0.0
    %222 = vmatprep.subr.mxu0 0.0
    %223 = vmatpush1.msra.mxu0 0.0
    %224 = vmatprep.subr.mxu0 0.0
    %225 = vmatpush1.msra.mxu0 0.0
    %226 = vmatprep.subr.mxu0 0.0
    %227 = vmatpush1.msra.mxu0 0.0
    %228 = vmatprep.subr.mxu0 0.0
    %229 = vmatpush1.msra.mxu0 0.0
    %230 = vmatprep.subr.mxu0 0.0
    %231 = vmatpush1.msra.mxu0 0.0
    %232 = vmatprep.subr.mxu0 0.0
    %233 = vmatpush1.msra.mxu0 0.0
    %234 = vmatprep.subr.mxu0 0.0
    %235 = vmatpush1.msra.mxu0 0.0
    %236 = vmatprep.subr.mxu0 0.0
    %237 = vmatpush1.msra.mxu0 0.0
    %238 = vmatprep.subr.mxu0 0.0
    %239 = vmatpush1.msra.mxu0 0.0
    %240 = vmatprep.subr.mxu0 0.0
    %241 = vmatpush1.msra.mxu0 0.0
    %242 = vmatprep.subr.mxu0 0.0
    %243 = vmatpush1.msra.mxu0 0.0
    %244 = vmatprep.subr.mxu0 0.0
    %245 = vmatpush1.msra.mxu0 0.0
    %246 = vmatprep.subr.mxu0 0.0
    %247 = vmatpush1.msra.mxu0 0.0
    %248 = vmatprep.subr.mxu0 0.0
    %249 = vmatpush1.msra.mxu0 0.0
    %250 = vmatprep.subr.mxu0 0.0
    %251 = vmatpush1.msra.mxu0 0.0
    %252 = vmatprep.subr.mxu0 0.0
    %253 = vmatpush1.msra.mxu0 0.0
    %254 = vmatprep.subr.mxu0 0.0
    %255 = vmatpush1.msra.mxu0 0.0
    %256 = vmatprep.subr.mxu0 0.0
    %257 = vmatpush1.msra.mxu0 0.0
    %258 = vmatprep.subr.mxu0 0.0
    %259 = vmatpush1.msra.mxu0 0.0
    %260 = vmatprep.subr.mxu0 0.0
    %261 = vmatpush1.msra.mxu0 0.0
    %262 = vmatprep.subr.mxu0 0.0
    %263 = vmatpush1.msra.mxu0 0.0
    %264 = vmatprep.subr.mxu0 0.0
    %265 = vmatpush1.msra.mxu0 0.0
    %266 = vmatprep.subr.mxu0 0.0
    %267 = vmatpush1.msra.mxu0 0.0
    %268 = vmatprep.mubr.f32.mxu0 0.0
    %269 = vmatmul.mubr.f32.gmra.mrb[0].mxu0 %v202
    %v270 = vpop.f32.mrb[0].mxu0
    %v271 = vadd.f32 %v198, %v270
    %v272 = vpop.f32.mrb[0].mxu0
    %273 = vdwg.mxu0
    %v274 = vmax.f32 %v271, 0.0
    %v275 = vld [vmem:[%s4] sm:$0xf]
    %v276 = vld [vmem:[%s5] sm:$0x1]
    %v278 = vlaneseq
    %v279 = vshrl.u32 %v278, 7
    %v280 = vsub.s32 0, %v279
    %v281 = vrot.slane %v276, %v280
    %vm283 = vcmask 31744
    %v285 = vsel %vm283, %v274, 0
    %vm287 = vcmask 1043456
    %v289 = vsel %vm287, %v275, 0
    %291 = vmatprep.subr.mxu0 0.0
    %292 = vmatpush1.msra.mxu0 %v289
    %293 = vmatprep.subr.mxu0 0.0
    %294 = vmatpush1.msra.mxu0 0.0
    %295 = vmatprep.subr.mxu0 0.0
    %296 = vmatpush1.msra.mxu0 0.0
    %297 = vmatprep.subr.mxu0 0.0
    %298 = vmatpush1.msra.mxu0 0.0
    %299 = vmatprep.subr.mxu0 0.0
    %300 = vmatpush1.msra.mxu0 0.0
    %301 = vmatprep.subr.mxu0 0.0
    %302 = vmatpush1.msra.mxu0 0.0
    %303 = vmatprep.subr.mxu0 0.0
    %304 = vmatpush1.msra.mxu0 0.0
    %305 = vmatprep.subr.mxu0 0.0
    %306 = vmatpush1.msra.mxu0 0.0
    %307 = vmatprep.subr.mxu0 0.0
    %308 = vmatpush1.msra.mxu0 0.0
    %309 = vmatprep.subr.mxu0 0.0
    %310 = vmatpush1.msra.mxu0 0.0
    %311 = vmatprep.subr.mxu0 0.0
    %312 = vmatpush1.msra.mxu0 0.0
    %313 = vmatprep.subr.mxu0 0.0
    %314 = vmatpush1.msra.mxu0 0.0
    %315 = vmatprep.subr.mxu0 0.0
    %316 = vmatpush1.msra.mxu0 0.0
    %317 = vmatprep.subr.mxu0 0.0
    %318 = vmatpush1.msra.mxu0 0.0
    %319 = vmatprep.subr.mxu0 0.0
    %320 = vmatpush1.msra.mxu0 0.0
    %321 = vmatprep.subr.mxu0 0.0
    %322 = vmatpush1.msra.mxu0 0.0
    %323 = vmatprep.subr.mxu0 0.0
    %324 = vmatpush1.msra.mxu0 0.0
    %325 = vmatprep.subr.mxu0 0.0
    %326 = vmatpush1.msra.mxu0 0.0
    %327 = vmatprep.subr.mxu0 0.0
    %328 = vmatpush1.msra.mxu0 0.0
    %329 = vmatprep.subr.mxu0 0.0
    %330 = vmatpush1.msra.mxu0 0.0
    %331 = vmatprep.subr.mxu0 0.0
    %332 = vmatpush1.msra.mxu0 0.0
    %333 = vmatprep.subr.mxu0 0.0
    %334 = vmatpush1.msra.mxu0 0.0
    %335 = vmatprep.subr.mxu0 0.0
    %336 = vmatpush1.msra.mxu0 0.0
    %337 = vmatprep.subr.mxu0 0.0
    %338 = vmatpush1.msra.mxu0 0.0
    %339 = vmatprep.subr.mxu0 0.0
    %340 = vmatpush1.msra.mxu0 0.0
    %341 = vmatprep.subr.mxu0 0.0
    %342 = vmatpush1.msra.mxu0 0.0
    %343 = vmatprep.subr.mxu0 0.0
    %344 = vmatpush1.msra.mxu0 0.0
    %345 = vmatprep.subr.mxu0 0.0
    %346 = vmatpush1.msra.mxu0 0.0
    %347 = vmatprep.subr.mxu0 0.0
    %348 = vmatpush1.msra.mxu0 0.0
    %349 = vmatprep.subr.mxu0 0.0
    %350 = vmatpush1.msra.mxu0 0.0
    %351 = vmatprep.subr.mxu0 0.0
    %352 = vmatpush1.msra.mxu0 0.0
    %353 = vmatprep.subr.mxu0 0.0
    %354 = vmatpush1.msra.mxu0 0.0
    %355 = vmatprep.mubr.f32.mxu0 0.0
    %356 = vmatmul.mubr.f32.gmra.mrb[0].mxu0 %v285
    %v357 = vpop.f32.mrb[0].mxu0
    %v358 = vadd.f32 %v281, %v357
    %v359 = vpop.f32.mrb[0].mxu0
    %360 = vdwg.mxu0
    %v361 = vxor.u32 %v358, 2147483648
    %v362 = vmul.f32 %v361, 1.442695
    %v363 = vpow.pop %v362
    %v364 = vadd.f32 %v363, 1.0
    %v365 = vrcp.pop %v364
    %v366 = vmul.f32 1.0, %v365
    %v367 = vld [vmem:[%s6] sm:$0xff]
    %v368 = vld [vmem:[%s6 + $0x8] sm:$0xff]
    %v369 = vld [vmem:[%s6 + $0x10] sm:$0xff]
    %v370 = vld [vmem:[%s6 + $0x18] sm:$0xff]
    %v372 = vsel %vm200, %v366, 0
    %374 = vmatprep.subr.mxu0 %v368
    %375 = vmatpush1.msra.mxu0 %v367
    %376 = vmatprep.subr.mxu0 %v370
    %377 = vmatpush1.msra.mxu0 %v369
    %378 = vmatprep.subr.mxu0 0.0
    %379 = vmatpush1.msra.mxu0 0.0
    %380 = vmatprep.subr.mxu0 0.0
    %381 = vmatpush1.msra.mxu0 0.0
    %382 = vmatprep.subr.mxu0 0.0
    %383 = vmatpush1.msra.mxu0 0.0
    %384 = vmatprep.subr.mxu0 0.0
    %385 = vmatpush1.msra.mxu0 0.0
    %386 = vmatprep.subr.mxu0 0.0
    %387 = vmatpush1.msra.mxu0 0.0
    %388 = vmatprep.subr.mxu0 0.0
    %389 = vmatpush1.msra.mxu0 0.0
    %390 = vmatprep.subr.mxu0 0.0
    %391 = vmatpush1.msra.mxu0 0.0
    %392 = vmatprep.subr.mxu0 0.0
    %393 = vmatpush1.msra.mxu0 0.0
    %394 = vmatprep.subr.mxu0 0.0
    %395 = vmatpush1.msra.mxu0 0.0
    %396 = vmatprep.subr.mxu0 0.0
    %397 = vmatpush1.msra.mxu0 0.0
    %398 = vmatprep.subr.mxu0 0.0
    %399 = vmatpush1.msra.mxu0 0.0
    %400 = vmatprep.subr.mxu0 0.0
    %401 = vmatpush1.msra.mxu0 0.0
    %402 = vmatprep.subr.mxu0 0.0
    %403 = vmatpush1.msra.mxu0 0.0
    %404 = vmatprep.subr.mxu0 0.0
    %405 = vmatpush1.msra.mxu0 0.0
    %406 = vmatprep.subr.mxu0 0.0
    %407 = vmatpush1.msra.mxu0 0.0
    %408 = vmatprep.subr.mxu0 0.0
    %409 = vmatpush1.msra.mxu0 0.0
    %410 = vmatprep.subr.mxu0 0.0
    %411 = vmatpush1.msra.mxu0 0.0
    %412 = vmatprep.subr.mxu0 0.0
    %413 = vmatpush1.msra.mxu0 0.0
    %414 = vmatprep.subr.mxu0 0.0
    %415 = vmatpush1.msra.mxu0 0.0
    %416 = vmatprep.subr.mxu0 0.0
    %417 = vmatpush1.msra.mxu0 0.0
    %418 = vmatprep.subr.mxu0 0.0
    %419 = vmatpush1.msra.mxu0 0.0
    %420 = vmatprep.subr.mxu0 0.0
    %421 = vmatpush1.msra.mxu0 0.0
    %422 = vmatprep.subr.mxu0 0.0
    %423 = vmatpush1.msra.mxu0 0.0
    %424 = vmatprep.subr.mxu0 0.0
    %425 = vmatpush1.msra.mxu0 0.0
    %426 = vmatprep.subr.mxu0 0.0
    %427 = vmatpush1.msra.mxu0 0.0
    %428 = vmatprep.subr.mxu0 0.0
    %429 = vmatpush1.msra.mxu0 0.0
    %430 = vmatprep.subr.mxu0 0.0
    %431 = vmatpush1.msra.mxu0 0.0
    %432 = vmatprep.subr.mxu0 0.0
    %433 = vmatpush1.msra.mxu0 0.0
    %434 = vmatprep.subr.mxu0 0.0
    %435 = vmatpush1.msra.mxu0 0.0
    %436 = vmatprep.subr.mxu0 0.0
    %437 = vmatpush1.msra.mxu0 0.0
    %438 = vmatprep.mubr.f32.mxu0 0.0
    %439 = vmatmul.mubr.f32.gmra.mrb[0].mxu0 %v372
    %v440 = vpop.f32.mrb[0].mxu0
    %v441 = vadd.f32 0.0, %v440
    %v442 = vpop.f32.mrb[0].mxu0
    %v443 = vadd.f32 0.0, %v442
    %444 = vdwg.mxu0
    %v447 = vcombine.low %v441, %v443
    %v449 = vunpack.c.l.s4 1966171168
    %v450 = vunpack.c.0.s8 %v449
    %v451 = vlaneseq
    %v452 = vshrl.u32 %v451, 7
    %v453 = vsub.s32 %v450, %v452
    %v454 = vrot.slane %v447, %v453
    %v455 = vcombine.high %v454, %v454
    %v457 = vunpack.c.l.s4 1966171168
    %v458 = vunpack.c.0.s8 %v457
    %v459 = vlaneseq
    %v460 = vshrl.u32 %v459, 7
    %v461 = vsub.s32 %v458, %v460
    %v462 = vrot.slane %v454, %v461
    %v464 = vunpack.c.l.s4 1966171168
    %v465 = vunpack.c.0.s8 %v464
    %v466 = vlaneseq
    %v467 = vshrl.u32 %v466, 7
    %v468 = vsub.s32 %v465, %v467
    %v469 = vrot.slane %v455, %v468
    %v470 = vlaneseq
    %v471 = vshrl.u32 %v470, 7
    %v472 = vsub.s32 0, %v471
    %v473 = vrot.slane %v462, %v472
    %v474 = vlaneseq
    %v475 = vshrl.u32 %v474, 7
    %v476 = vsub.s32 1, %v475
    %v477 = vrot.slane %v462, %v476
    %v478 = vlaneseq
    %v479 = vshrl.u32 %v478, 7
    %v480 = vsub.s32 0, %v479
    %v481 = vrot.slane %v469, %v480
    %v482 = vlaneseq
    %v483 = vshrl.u32 %v482, 7
    %v484 = vsub.s32 1, %v483
    %v485 = vrot.slane %v469, %v484
    %v490 = vmul.f32 %v44, %v473
    %v491 = vmul.f32 %v45, %v477
    %v492 = vmul.f32 %v46, %v473
    %v493 = vmul.f32 %v47, %v477
    %v494 = vmul.f32 %v48, %v481
    %v495 = vmul.f32 %v49, %v485
    %v496 = vmul.f32 %v50, %v481
    %v497 = vmul.f32 %v51, %v485
    %v498 = vld [vmem:[%s7] sm:$0xff]
    %v499 = vld [vmem:[%s7 + $0x8] sm:$0xff]
    %v500 = vld [vmem:[%s7 + $0x10] sm:$0xff]
    %v501 = vld [vmem:[%s7 + $0x18] sm:$0xff]
    %v502 = vld [vmem:[%s7 + $0x20] sm:$0xff]
    %v503 = vld [vmem:[%s7 + $0x28] sm:$0xff]
    %v504 = vld [vmem:[%s7 + $0x30] sm:$0xff]
    %v505 = vld [vmem:[%s7 + $0x38] sm:$0xff]
    %v506 = vld [vmem:[%s7 + $0x40] sm:$0xff]
    %v507 = vld [vmem:[%s7 + $0x48] sm:$0xff]
    %v508 = vld [vmem:[%s7 + $0x50] sm:$0xff]
    %v509 = vld [vmem:[%s7 + $0x58] sm:$0xff]
    %v510 = vld [vmem:[%s7 + $0x60] sm:$0xff]
    %v511 = vld [vmem:[%s7 + $0x68] sm:$0xff]
    %v512 = vld [vmem:[%s7 + $0x70] sm:$0xff]
    %v513 = vld [vmem:[%s7 + $0x78] sm:$0xff]
    %v514 = vld [vmem:[%s7 + $0x80] sm:$0xff]
    %v515 = vld [vmem:[%s7 + $0x88] sm:$0xff]
    %v516 = vld [vmem:[%s7 + $0x90] sm:$0xff]
    %v517 = vld [vmem:[%s7 + $0x98] sm:$0xff]
    %v518 = vld [vmem:[%s7 + $0xa0] sm:$0xff]
    %v519 = vld [vmem:[%s7 + $0xa8] sm:$0xff]
    %v520 = vld [vmem:[%s7 + $0xb0] sm:$0xff]
    %v521 = vld [vmem:[%s7 + $0xb8] sm:$0xff]
    %v522 = vld [vmem:[%s7 + $0xc0] sm:$0xff]
    %v523 = vld [vmem:[%s7 + $0xc8] sm:$0xff]
    %v524 = vld [vmem:[%s7 + $0xd0] sm:$0xff]
    %v525 = vld [vmem:[%s7 + $0xd8] sm:$0xff]
    %v526 = vld [vmem:[%s7 + $0xe0] sm:$0xff]
    %v527 = vld [vmem:[%s7 + $0xe8] sm:$0xff]
    %v528 = vld [vmem:[%s7 + $0xf0] sm:$0xff]
    %v529 = vld [vmem:[%s7 + $0xf8] sm:$0xff]
    %530 = vmatprep.subr.mxu0 0.0
    %531 = vmatpush1.msra.mxu0 %v498
    %532 = vmatprep.subr.mxu0 0.0
    %533 = vmatpush1.msra.mxu0 %v499
    %534 = vmatprep.subr.mxu0 0.0
    %535 = vmatpush1.msra.mxu0 %v500
    %536 = vmatprep.subr.mxu0 0.0
    %537 = vmatpush1.msra.mxu0 %v501
    %538 = vmatprep.subr.mxu0 0.0
    %539 = vmatpush1.msra.mxu0 %v502
    %540 = vmatprep.subr.mxu0 0.0
    %541 = vmatpush1.msra.mxu0 %v503
    %542 = vmatprep.subr.mxu0 0.0
    %543 = vmatpush1.msra.mxu0 %v504
    %544 = vmatprep.subr.mxu0 0.0
    %545 = vmatpush1.msra.mxu0 %v505
    %546 = vmatprep.subr.mxu0 0.0
    %547 = vmatpush1.msra.mxu0 %v506
    %548 = vmatprep.subr.mxu0 0.0
    %549 = vmatpush1.msra.mxu0 %v507
    %550 = vmatprep.subr.mxu0 0.0
    %551 = vmatpush1.msra.mxu0 %v508
    %552 = vmatprep.subr.mxu0 0.0
    %553 = vmatpush1.msra.mxu0 %v509
    %554 = vmatprep.subr.mxu0 0.0
    %555 = vmatpush1.msra.mxu0 %v510
    %556 = vmatprep.subr.mxu0 0.0
    %557 = vmatpush1.msra.mxu0 %v511
    %558 = vmatprep.subr.mxu0 0.0
    %559 = vmatpush1.msra.mxu0 %v512
    %560 = vmatprep.subr.mxu0 0.0
    %561 = vmatpush1.msra.mxu0 %v513
    %562 = vmatprep.subr.mxu0 0.0
    %563 = vmatpush1.msra.mxu0 %v514
    %564 = vmatprep.subr.mxu0 0.0
    %565 = vmatpush1.msra.mxu0 %v515
    %566 = vmatprep.subr.mxu0 0.0
    %567 = vmatpush1.msra.mxu0 %v516
    %568 = vmatprep.subr.mxu0 0.0
    %569 = vmatpush1.msra.mxu0 %v517
    %570 = vmatprep.subr.mxu0 0.0
    %571 = vmatpush1.msra.mxu0 %v518
    %572 = vmatprep.subr.mxu0 0.0
    %573 = vmatpush1.msra.mxu0 %v519
    %574 = vmatprep.subr.mxu0 0.0
    %575 = vmatpush1.msra.mxu0 %v520
    %576 = vmatprep.subr.mxu0 0.0
    %577 = vmatpush1.msra.mxu0 %v521
    %578 = vmatprep.subr.mxu0 0.0
    %579 = vmatpush1.msra.mxu0 %v522
    %580 = vmatprep.subr.mxu0 0.0
    %581 = vmatpush1.msra.mxu0 %v523
    %582 = vmatprep.subr.mxu0 0.0
    %583 = vmatpush1.msra.mxu0 %v524
    %584 = vmatprep.subr.mxu0 0.0
    %585 = vmatpush1.msra.mxu0 %v525
    %586 = vmatprep.subr.mxu0 0.0
    %587 = vmatpush1.msra.mxu0 %v526
    %588 = vmatprep.subr.mxu0 0.0
    %589 = vmatpush1.msra.mxu0 %v527
    %590 = vmatprep.subr.mxu0 0.0
    %591 = vmatpush1.msra.mxu0 %v528
    %592 = vmatprep.subr.mxu0 0.0
    %593 = vmatpush1.msra.mxu0 %v529
    %594 = vmatprep.mubr.f32.mxu0 %v491
    %595 = vmatmul.mubr.f32.gmra.mrb[0].mxu0 %v490
    %v596 = vpop.f32.mrb[0].mxu0
    %v597 = vadd.f32 0.0, %v596
    %v598 = vpop.f32.mrb[0].mxu0
    %599 = vmatprep.mubr.f32.mxu0 %v493
    %600 = vmatmul.mubr.f32.gmra.mrb[0].mxu0 %v492
    %v601 = vpop.f32.mrb[0].mxu0
    %v602 = vadd.f32 0.0, %v601
    %v603 = vpop.f32.mrb[0].mxu0
    %604 = vmatprep.mubr.f32.mxu0 %v495
    %605 = vmatmul.mubr.f32.gmra.mrb[0].mxu0 %v494
    %v606 = vpop.f32.mrb[0].mxu0
    %v607 = vadd.f32 0.0, %v606
    %v608 = vpop.f32.mrb[0].mxu0
    %609 = vmatprep.mubr.f32.mxu0 %v497
    %610 = vmatmul.mubr.f32.gmra.mrb[0].mxu0 %v496
    %v611 = vpop.f32.mrb[0].mxu0
    %v612 = vadd.f32 0.0, %v611
    %v613 = vpop.f32.mrb[0].mxu0
    %614 = vdwg.mxu0
    %vm619 = vcmask 1042432
    %v620 = vrot.slane %v597, 5
    %v621 = vrot.slane %v602, 5
    %v622 = vsel %vm619, %v620, %v621
    %v623 = vrot.slane %v607, 5
    %v624 = vrot.slane %v612, 5
    %v625 = vsel %vm619, %v623, %v624
    %v632 = vsel %vm619, 0.0, %v620
    %v633 = vsel %vm619, 0.0, %v623
    %v634 = vsel %vm619, %v621, 0.0
    %v635 = vsel %vm619, %v624, 0.0
    %vm640 = vcmask 1046528
    %v641 = vrot.slane %v632, 1
    %v642 = vrot.slane %v622, 1
    %v643 = vsel %vm640, %v641, %v642
    %v644 = vrot.slane %v634, 1
    %v645 = vsel %vm640, %v642, %v644
    %v646 = vrot.slane %v633, 1
    %v647 = vrot.slane %v625, 1
    %v648 = vsel %vm640, %v646, %v647
    %v649 = vrot.slane %v635, 1
    %v650 = vsel %vm640, %v647, %v649
    %651 = vrot.lane.b32.xlu0 %v643, 112
    %v652 = vpop.permute.xlu0 %651
    %653 = vrot.lane.b32.xlu0 %v645, 112
    %v654 = vpop.permute.xlu0 %653
    %655 = vrot.lane.b32.xlu0 %v648, 112
    %v656 = vpop.permute.xlu0 %655
    %657 = vrot.lane.b32.xlu0 %v650, 112
    %v658 = vpop.permute.xlu0 %657
    %v663 = vadd.f32 %v632, %v652
    %v664 = vadd.f32 %v622, %v654
    %v665 = vadd.f32 %v633, %v656
    %v666 = vadd.f32 %v625, %v658
    %667 = vrot.lane.b32.xlu0 %v644, 112
    %v668 = vpop.permute.xlu0 %667
    %669 = vrot.lane.b32.xlu0 %v649, 112
    %v670 = vpop.permute.xlu0 %669
    %v673 = vadd.f32 %v634, %v668
    %v674 = vadd.f32 %v635, %v670
    %vm681 = vcmask 1045504
    %v682 = vrot.slane %v663, 2
    %v683 = vrot.slane %v664, 2
    %v684 = vsel %vm681, %v682, %v683
    %v685 = vrot.slane %v673, 2
    %v686 = vsel %vm681, %v683, %v685
    %v687 = vrot.slane %v665, 2
    %v688 = vrot.slane %v666, 2
    %v689 = vsel %vm681, %v687, %v688
    %v690 = vrot.slane %v674, 2
    %v691 = vsel %vm681, %v688, %v690
    %692 = vrot.lane.b32.xlu0 %v684, 96
    %v693 = vpop.permute.xlu0 %692
    %694 = vrot.lane.b32.xlu0 %v686, 96
    %v695 = vpop.permute.xlu0 %694
    %696 = vrot.lane.b32.xlu0 %v689, 96
    %v697 = vpop.permute.xlu0 %696
    %698 = vrot.lane.b32.xlu0 %v691, 96
    %v699 = vpop.permute.xlu0 %698
    %v704 = vadd.f32 %v663, %v693
    %v705 = vadd.f32 %v664, %v695
    %v706 = vadd.f32 %v665, %v697
    %v707 = vadd.f32 %v666, %v699
    %v708 = vrot.slane %v632, 2
    %v709 = vrot.slane %v622, 2
    %v710 = vsel %vm681, %v708, %v709
    %v711 = vrot.slane %v634, 2
    %v712 = vsel %vm681, %v709, %v711
    %v713 = vrot.slane %v633, 2
    %v714 = vrot.slane %v625, 2
    %v715 = vsel %vm681, %v713, %v714
    %v716 = vrot.slane %v635, 2
    %v717 = vsel %vm681, %v714, %v716
    %718 = vrot.lane.b32.xlu0 %v710, 96
    %v719 = vpop.permute.xlu0 %718
    %720 = vrot.lane.b32.xlu0 %v712, 96
    %v721 = vpop.permute.xlu0 %720
    %722 = vrot.lane.b32.xlu0 %v711, 96
    %v723 = vpop.permute.xlu0 %722
    %724 = vrot.lane.b32.xlu0 %v715, 96
    %v725 = vpop.permute.xlu0 %724
    %726 = vrot.lane.b32.xlu0 %v717, 96
    %v727 = vpop.permute.xlu0 %726
    %728 = vrot.lane.b32.xlu0 %v716, 96
    %v729 = vpop.permute.xlu0 %728
    %v736 = vadd.f32 %v663, %v719
    %v737 = vadd.f32 %v664, %v721
    %v738 = vadd.f32 %v673, %v723
    %v739 = vadd.f32 %v665, %v725
    %v740 = vadd.f32 %v666, %v727
    %v741 = vadd.f32 %v674, %v729
    %v748 = vrot.slane %v736, 4
    %v749 = vrot.slane %v737, 4
    %v750 = vsel %vm287, %v748, %v749
    %v751 = vrot.slane %v738, 4
    %v752 = vsel %vm287, %v749, %v751
    %v753 = vrot.slane %v739, 4
    %v754 = vrot.slane %v740, 4
    %v755 = vsel %vm287, %v753, %v754
    %v756 = vrot.slane %v741, 4
    %v757 = vsel %vm287, %v754, %v756
    %758 = vrot.lane.b32.xlu0 %v750, 64
    %v759 = vpop.permute.xlu0 %758
    %760 = vrot.lane.b32.xlu0 %v752, 64
    %v761 = vpop.permute.xlu0 %760
    %762 = vrot.lane.b32.xlu0 %v755, 64
    %v763 = vpop.permute.xlu0 %762
    %764 = vrot.lane.b32.xlu0 %v757, 64
    %v765 = vpop.permute.xlu0 %764
    %v770 = vadd.f32 %v704, %v759
    %v771 = vadd.f32 %v705, %v761
    %v772 = vadd.f32 %v706, %v763
    %v773 = vadd.f32 %v707, %v765
    %v774 = vld [vmem:[#allocation2] sm:$0x1]
    %v776 = vlaneseq
    %v777 = vshrl.u32 %v776, 7
    %v778 = vsub.s32 0, %v777
    %v779 = vrot.slane %v774, %v778
    %780 = vset.pattern.permute.xlu0 0
    %781 = vperm.xlu0 %780, %v779
    %v782 = vpop.permute.xlu0 %781
    %v784 = vadd.f32 %v770, %v782
    %v785 = vadd.f32 %v771, %v782
    %v786 = vadd.f32 %v772, %v782
    %v787 = vadd.f32 %v773, %v782
    %v788 = vxor.u32 %v784, 2147483648
    %v789 = vxor.u32 %v785, 2147483648
    %v790 = vxor.u32 %v786, 2147483648
    %v791 = vxor.u32 %v787, 2147483648
    %v792 = vmul.f32 %v788, 1.442695
    %v793 = vpow.pop %v792
    %v794 = vmul.f32 %v789, 1.442695
    %v795 = vpow.pop %v794
    %v796 = vmul.f32 %v790, 1.442695
    %v797 = vpow.pop %v796
    %v798 = vmul.f32 %v791, 1.442695
    %v799 = vpow.pop %v798
    %v800 = vadd.f32 %v793, 1.0
    %v801 = vadd.f32 %v795, 1.0
    %v802 = vadd.f32 %v797, 1.0
    %v803 = vadd.f32 %v799, 1.0
    %v804 = vrcp.pop %v800
    %v805 = vmul.f32 1.0, %v804
    %v806 = vrcp.pop %v801
    %v807 = vmul.f32 1.0, %v806
    %v808 = vrcp.pop %v802
    %v809 = vmul.f32 1.0, %v808
    %v810 = vrcp.pop %v803
    %v811 = vmul.f32 1.0, %v810
    %v812 = vld [vmem:[%s10] sm:$0xff]
    %v813 = vld [vmem:[%s10 + $0x8] sm:$0xff]
    %v815 = vsel %vm200, %v805, 0
    %v818 = vsel %vm200, %v807, 0
    %v821 = vsel %vm200, %v809, 0
    %v824 = vsel %vm200, %v811, 0
    %826 = vmatprep.subr.mxu0 0.0
    %827 = vmatpush1.msra.mxu0 %v812
    %828 = vmatprep.subr.mxu0 0.0
    %829 = vmatpush1.msra.mxu0 %v813
    %830 = vmatprep.subr.mxu0 0.0
    %831 = vmatpush1.msra.mxu0 0.0
    %832 = vmatprep.subr.mxu0 0.0
    %833 = vmatpush1.msra.mxu0 0.0
    %834 = vmatprep.subr.mxu0 0.0
    %835 = vmatpush1.msra.mxu0 0.0
    %836 = vmatprep.subr.mxu0 0.0
    %837 = vmatpush1.msra.mxu0 0.0
    %838 = vmatprep.subr.mxu0 0.0
    %839 = vmatpush1.msra.mxu0 0.0
    %840 = vmatprep.subr.mxu0 0.0
    %841 = vmatpush1.msra.mxu0 0.0
    %842 = vmatprep.subr.mxu0 0.0
    %843 = vmatpush1.msra.mxu0 0.0
    %844 = vmatprep.subr.mxu0 0.0
    %845 = vmatpush1.msra.mxu0 0.0
    %846 = vmatprep.subr.mxu0 0.0
    %847 = vmatpush1.msra.mxu0 0.0
    %848 = vmatprep.subr.mxu0 0.0
    %849 = vmatpush1.msra.mxu0 0.0
    %850 = vmatprep.subr.mxu0 0.0
    %851 = vmatpush1.msra.mxu0 0.0
    %852 = vmatprep.subr.mxu0 0.0
    %853 = vmatpush1.msra.mxu0 0.0
    %854 = vmatprep.subr.mxu0 0.0
    %855 = vmatpush1.msra.mxu0 0.0
    %856 = vmatprep.subr.mxu0 0.0
    %857 = vmatpush1.msra.mxu0 0.0
    %858 = vmatprep.subr.mxu0 0.0
    %859 = vmatpush1.msra.mxu0 0.0
    %860 = vmatprep.subr.mxu0 0.0
    %861 = vmatpush1.msra.mxu0 0.0
    %862 = vmatprep.subr.mxu0 0.0
    %863 = vmatpush1.msra.mxu0 0.0
    %864 = vmatprep.subr.mxu0 0.0
    %865 = vmatpush1.msra.mxu0 0.0
    %866 = vmatprep.subr.mxu0 0.0
    %867 = vmatpush1.msra.mxu0 0.0
    %868 = vmatprep.subr.mxu0 0.0
    %869 = vmatpush1.msra.mxu0 0.0
    %870 = vmatprep.subr.mxu0 0.0
    %871 = vmatpush1.msra.mxu0 0.0
    %872 = vmatprep.subr.mxu0 0.0
    %873 = vmatpush1.msra.mxu0 0.0
    %874 = vmatprep.subr.mxu0 0.0
    %875 = vmatpush1.msra.mxu0 0.0
    %876 = vmatprep.subr.mxu0 0.0
    %877 = vmatpush1.msra.mxu0 0.0
    %878 = vmatprep.subr.mxu0 0.0
    %879 = vmatpush1.msra.mxu0 0.0
    %880 = vmatprep.subr.mxu0 0.0
    %881 = vmatpush1.msra.mxu0 0.0
    %882 = vmatprep.subr.mxu0 0.0
    %883 = vmatpush1.msra.mxu0 0.0
    %884 = vmatprep.subr.mxu0 0.0
    %885 = vmatpush1.msra.mxu0 0.0
    %886 = vmatprep.subr.mxu0 0.0
    %887 = vmatpush1.msra.mxu0 0.0
    %888 = vmatprep.subr.mxu0 0.0
    %889 = vmatpush1.msra.mxu0 0.0
    %890 = vmatprep.mubr.f32.mxu0 0.0
    %891 = vmatmul.mubr.f32.gmra.mrb[0].mxu0 %v815
    %v892 = vpop.f32.mrb[0].mxu0
    %v893 = vadd.f32 0.0, %v892
    %v894 = vpop.f32.mrb[0].mxu0
    %895 = vmatprep.mubr.f32.mxu0 0.0
    %896 = vmatmul.mubr.f32.gmra.mrb[0].mxu0 %v818
    %v897 = vpop.f32.mrb[0].mxu0
    %v898 = vadd.f32 0.0, %v897
    %v899 = vpop.f32.mrb[0].mxu0
    %900 = vmatprep.mubr.f32.mxu0 0.0
    %901 = vmatmul.mubr.f32.gmra.mrb[0].mxu0 %v821
    %v902 = vpop.f32.mrb[0].mxu0
    %v903 = vadd.f32 0.0, %v902
    %v904 = vpop.f32.mrb[0].mxu0
    %905 = vmatprep.mubr.f32.mxu0 0.0
    %906 = vmatmul.mubr.f32.gmra.mrb[0].mxu0 %v824
    %v907 = vpop.f32.mrb[0].mxu0
    %v908 = vadd.f32 0.0, %v907
    %v909 = vpop.f32.mrb[0].mxu0
    %910 = vdwg.mxu0
    %v911 = vld [vmem:[%s9] sm:$0xff]
    %v912 = vld [vmem:[%s9 + $0x8] sm:$0xff]
    %v913 = vld [vmem:[%s9 + $0x10] sm:$0xff]
    %v914 = vld [vmem:[%s9 + $0x18] sm:$0xff]
    %v915 = vld [vmem:[%s9 + $0x20] sm:$0xff]
    %v916 = vld [vmem:[%s9 + $0x28] sm:$0xff]
    %v917 = vld [vmem:[%s9 + $0x30] sm:$0xff]
    %v918 = vld [vmem:[%s9 + $0x38] sm:$0xff]
    %v919 = vld [vmem:[%s9 + $0x40] sm:$0xff]
    %v920 = vld [vmem:[%s9 + $0x48] sm:$0xff]
    %v921 = vld [vmem:[%s9 + $0x50] sm:$0xff]
    %v922 = vld [vmem:[%s9 + $0x58] sm:$0xff]
    %v923 = vld [vmem:[%s9 + $0x60] sm:$0xff]
    %v924 = vld [vmem:[%s9 + $0x68] sm:$0xff]
    %v925 = vld [vmem:[%s9 + $0x70] sm:$0xff]
    %v926 = vld [vmem:[%s9 + $0x78] sm:$0xff]
    %v927 = vld [vmem:[%s9 + $0x80] sm:$0xff]
    %v928 = vld [vmem:[%s9 + $0x88] sm:$0xff]
    %v929 = vld [vmem:[%s9 + $0x90] sm:$0xff]
    %v930 = vld [vmem:[%s9 + $0x98] sm:$0xff]
    %v931 = vld [vmem:[%s9 + $0xa0] sm:$0xff]
    %v932 = vld [vmem:[%s9 + $0xa8] sm:$0xff]
    %v933 = vld [vmem:[%s9 + $0xb0] sm:$0xff]
    %v934 = vld [vmem:[%s9 + $0xb8] sm:$0xff]
    %v935 = vld [vmem:[%s9 + $0xc0] sm:$0xff]
    %v936 = vld [vmem:[%s9 + $0xc8] sm:$0xff]
    %v937 = vld [vmem:[%s9 + $0xd0] sm:$0xff]
    %v938 = vld [vmem:[%s9 + $0xd8] sm:$0xff]
    %v939 = vld [vmem:[%s9 + $0xe0] sm:$0xff]
    %v940 = vld [vmem:[%s9 + $0xe8] sm:$0xff]
    %v941 = vld [vmem:[%s9 + $0xf0] sm:$0xff]
    %v942 = vld [vmem:[%s9 + $0xf8] sm:$0xff]
    %943 = vmatprep.subr.mxu0 0.0
    %944 = vmatpush1.msra.mxu0 %v911
    %945 = vmatprep.subr.mxu0 0.0
    %946 = vmatpush1.msra.mxu0 %v912
    %947 = vmatprep.subr.mxu0 0.0
    %948 = vmatpush1.msra.mxu0 %v913
    %949 = vmatprep.subr.mxu0 0.0
    %950 = vmatpush1.msra.mxu0 %v914
    %951 = vmatprep.subr.mxu0 0.0
    %952 = vmatpush1.msra.mxu0 %v915
    %953 = vmatprep.subr.mxu0 0.0
    %954 = vmatpush1.msra.mxu0 %v916
    %955 = vmatprep.subr.mxu0 0.0
    %956 = vmatpush1.msra.mxu0 %v917
    %957 = vmatprep.subr.mxu0 0.0
    %958 = vmatpush1.msra.mxu0 %v918
    %959 = vmatprep.subr.mxu0 0.0
    %960 = vmatpush1.msra.mxu0 %v919
    %961 = vmatprep.subr.mxu0 0.0
    %962 = vmatpush1.msra.mxu0 %v920
    %963 = vmatprep.subr.mxu0 0.0
    %964 = vmatpush1.msra.mxu0 %v921
    %965 = vmatprep.subr.mxu0 0.0
    %966 = vmatpush1.msra.mxu0 %v922
    %967 = vmatprep.subr.mxu0 0.0
    %968 = vmatpush1.msra.mxu0 %v923
    %969 = vmatprep.subr.mxu0 0.0
    %970 = vmatpush1.msra.mxu0 %v924
    %971 = vmatprep.subr.mxu0 0.0
    %972 = vmatpush1.msra.mxu0 %v925
    %973 = vmatprep.subr.mxu0 0.0
    %974 = vmatpush1.msra.mxu0 %v926
    %975 = vmatprep.subr.mxu0 0.0
    %976 = vmatpush1.msra.mxu0 %v927
    %977 = vmatprep.subr.mxu0 0.0
    %978 = vmatpush1.msra.mxu0 %v928
    %979 = vmatprep.subr.mxu0 0.0
    %980 = vmatpush1.msra.mxu0 %v929
    %981 = vmatprep.subr.mxu0 0.0
    %982 = vmatpush1.msra.mxu0 %v930
    %983 = vmatprep.subr.mxu0 0.0
    %984 = vmatpush1.msra.mxu0 %v931
    %985 = vmatprep.subr.mxu0 0.0
    %986 = vmatpush1.msra.mxu0 %v932
    %987 = vmatprep.subr.mxu0 0.0
    %988 = vmatpush1.msra.mxu0 %v933
    %989 = vmatprep.subr.mxu0 0.0
    %990 = vmatpush1.msra.mxu0 %v934
    %991 = vmatprep.subr.mxu0 0.0
    %992 = vmatpush1.msra.mxu0 %v935
    %993 = vmatprep.subr.mxu0 0.0
    %994 = vmatpush1.msra.mxu0 %v936
    %995 = vmatprep.subr.mxu0 0.0
    %996 = vmatpush1.msra.mxu0 %v937
    %997 = vmatprep.subr.mxu0 0.0
    %998 = vmatpush1.msra.mxu0 %v938
    %999 = vmatprep.subr.mxu0 0.0
    %1000 = vmatpush1.msra.mxu0 %v939
    %1001 = vmatprep.subr.mxu0 0.0
    %1002 = vmatpush1.msra.mxu0 %v940
    %1003 = vmatprep.subr.mxu0 0.0
    %1004 = vmatpush1.msra.mxu0 %v941
    %1005 = vmatprep.subr.mxu0 0.0
    %1006 = vmatpush1.msra.mxu0 %v942
    %1007 = vmatprep.mubr.f32.mxu0 %v491
    %1008 = vmatmul.mubr.f32.gmra.mrb[0].mxu0 %v490
    %v1009 = vpop.f32.mrb[0].mxu0
    %v1010 = vadd.f32 0.0, %v1009
    %v1011 = vpop.f32.mrb[0].mxu0
    %1012 = vmatprep.mubr.f32.mxu0 %v493
    %1013 = vmatmul.mubr.f32.gmra.mrb[0].mxu0 %v492
    %v1014 = vpop.f32.mrb[0].mxu0
    %v1015 = vadd.f32 0.0, %v1014
    %v1016 = vpop.f32.mrb[0].mxu0
    %1017 = vmatprep.mubr.f32.mxu0 %v495
    %1018 = vmatmul.mubr.f32.gmra.mrb[0].mxu0 %v494
    %v1019 = vpop.f32.mrb[0].mxu0
    %v1020 = vadd.f32 0.0, %v1019
    %v1021 = vpop.f32.mrb[0].mxu0
    %1022 = vmatprep.mubr.f32.mxu0 %v497
    %1023 = vmatmul.mubr.f32.gmra.mrb[0].mxu0 %v496
    %v1024 = vpop.f32.mrb[0].mxu0
    %v1025 = vadd.f32 0.0, %v1024
    %v1026 = vpop.f32.mrb[0].mxu0
    %1027 = vdwg.mxu0
    %v1028 = vmul.f32 %v1010, %v893
    %v1029 = vmul.f32 %v1015, %v898
    %v1030 = vmul.f32 %v1020, %v903
    %v1031 = vmul.f32 %v1025, %v908
    %v1032 = vld [vmem:[%s11] sm:$0x1]
    %v1034 = vlaneseq
    %v1035 = vshrl.u32 %v1034, 7
    %v1036 = vsub.s32 0, %v1035
    %v1037 = vrot.slane %v1032, %v1036
    %v1039 = vadd.f32 %v1028, %v1037
    %v1040 = vadd.f32 %v1029, %v1037
    %v1041 = vadd.f32 %v1030, %v1037
    %v1042 = vadd.f32 %v1031, %v1037
    %1043 = vst [vmem:[#allocation3] sm:$0xff] %v1039
    %1044 = vst [vmem:[#allocation3 + $0x8] sm:$0xff] %v1040
    %1045 = vst [vmem:[#allocation3 + $0x10] sm:$0xff] %v1041
    %1046 = vst [vmem:[#allocation3 + $0x18] sm:$0xff] %v1042
    // Predicated region
    $region50: #{tpu_custom_call.1} parent=1 // pred_check
      _
    $region51: #{tpu_custom_call.1} parent=1 // pred_check_branch
      %1048 = sbr.rel (0) target = $region53
    $region52: #{tpu_custom_call.1} parent=1 // pred_region
      %s1050 = ssub.s32 512, 512
      %1051 = vsyncadd [#allocation4], %s1050
      %s1052 = sshll.u32 [#allocation3], 4
      %s1053 = int_to_ptr.vmem [resolvable:$true] %s1052
      %1058 = dma.vmem_to_hbm [thread:$0]  %s1053, 512, %s12, [#allocation4], 128, 128, 8
    $region53: #{tpu_custom_call.1} parent=1 // pred_fallthru
      _
    // Predicated region
    $region54: #{tpu_custom_call.1} parent=1 // pred_check
      _
    $region55: #{tpu_custom_call.1} parent=1 // pred_check_branch
      %1060 = sbr.rel (0) target = $region57
    $region56: #{tpu_custom_call.1} parent=1 // pred_region
      %1061 = dma.done [#allocation4], 512
    $region57: #{tpu_custom_call.1} parent=1 // pred_fallthru
      _
    %1062 = vsyncpa [#allocation4], 1

</llo_original>
